<compile_context>
chip_gen: v7x
topology: tpu7x:2x2x1
jax: 0.10.0
libtpu: 0.0.40
codegen_flags: <defaults>
</compile_context>

<pallas_src>
import functools

import jax
import jax.numpy as jnp
from jax import lax
from jax.experimental import pallas as pl
from jax.experimental.pallas import tpu as pltpu


def _round_up(x, m):
    return ((x + m - 1) // m) * m


# ---------------------------------------------------------------------------
# Kernel body
# ---------------------------------------------------------------------------
def _adapter_kernel(x_ref, wd_ref, bd_ref, wu_ref, bu_ref, o_ref, *, dchunk, n_chunks):
    """down-project -> bias -> ReLU -> up-project -> bias -> residual (one row tile)."""
    x = x_ref[...]                                                      # (tm, Dp) native dtype
    # Down projection: native-dtype MXU operands, f32 accumulation.
    h = jnp.dot(x, wd_ref[...], preferred_element_type=jnp.float32)    # (tm, Rp) f32
    h = jnp.maximum(h + bd_ref[...].astype(jnp.float32), 0.0)
    # Cast hidden back to the weight dtype so bf16 weights stay on the fast MXU
    # path (no-op for f32 weights).
    h = h.astype(wu_ref.dtype)

    if n_chunks == 1:
        # Single lane-slab: no loop machinery needed.
        y = jnp.dot(h, wu_ref[...], preferred_element_type=jnp.float32)
        y = y + bu_ref[...].astype(jnp.float32) + x.astype(jnp.float32)
        o_ref[...] = y.astype(o_ref.dtype)
    else:
        # Chunk the up-projection + bias + residual over the lane (D) axis so the
        # live f32 intermediates are tm*dchunk*4 bytes instead of ~2*tm*Dp*4.
        def chunk_body(c, carry):
            start = pl.multiple_of(c * dchunk, 128)
            y = jnp.dot(h, wu_ref[:, pl.ds(start, dchunk)],
                        preferred_element_type=jnp.float32)            # (tm, dchunk) f32
            y = y + bu_ref[:, pl.ds(start, dchunk)].astype(jnp.float32)
            y = y + x_ref[:, pl.ds(start, dchunk)].astype(jnp.float32)
            o_ref[:, pl.ds(start, dchunk)] = y.astype(o_ref.dtype)
            return carry

        lax.fori_loop(0, n_chunks, chunk_body, 0, unroll=True)


# ---------------------------------------------------------------------------
# VMEM budgeting / tile selection
# ---------------------------------------------------------------------------
_EPILOGUE_CHUNK = 512   # lane slab for the up-projection epilogue
_MIN_GRID_STEPS = 4     # >= 2 steps per TensorCore on v7x; keeps the pipeline fed


def _pick_dchunk(Dp):
    """Largest lane slab (<= 512) that evenly divides Dp (Dp is a multiple of 128)."""
    if Dp <= _EPILOGUE_CHUNK:
        return Dp
    for c in (512, 384, 256, 128):
        if Dp % c == 0:
            return c
    return 128


def _vmem_config():
    """(tile_budget_bytes, vmem_limit_bytes) derived from the chip's VMEM capacity."""
    cap = 64 * 1024 * 1024          # conservative fallback: v7x per-TC VMEM
    try:
        info = pltpu.get_tpu_info()
        c = getattr(info, "vmem_capacity_bytes", None)
        if c:
            cap = int(c)
    except Exception:
        pass
    vmem_limit = min(int(cap * 0.70), cap - (8 << 20))   # leave real headroom below physical
    tile_budget = int(vmem_limit * 0.80)                 # headroom for compiler internals
    return tile_budget, vmem_limit


def _choose_tm(M, Dp, Rp, dchunk, itemsize, budget_bytes):
    """Largest row tile (<=512) whose full working set fits the VMEM budget."""
    per_row = (
        4 * Dp * itemsize            # 2 input + 2 output pipelined row tiles
        + Rp * 4 + Rp * itemsize     # hidden h (f32) + h cast to weight dtype
        + 2 * dchunk * 4             # per-chunk f32 up-proj result + f32 residual slice
    )
    # Resident weights/biases; counted double-buffered as a conservative bound even
    # though they are requested single-buffered (pl.Buffered(1)).
    weight_bytes = 2 * (Dp * Rp + Rp + Rp * Dp + Dp) * itemsize
    avail = max(budget_bytes - weight_bytes, 8 * per_row)
    cap = max(8, avail // per_row)

    min_step_rows = _round_up((M + _MIN_GRID_STEPS - 1) // _MIN_GRID_STEPS, 8)
    tm = min(512, cap, min_step_rows)
    if tm >= 128:
        tm = (tm // 128) * 128       # align to the MXU M-stream
    else:
        tm = max(8, (tm // 8) * 8)   # (8,128) sublane constraint
    return int(tm)


# ---------------------------------------------------------------------------
# Host wrapper
# ---------------------------------------------------------------------------
@jax.jit
def adapter_forward(x, w_down, b_down, w_up, b_up):
    """x: (B, S, D). w_down: (D, R), b_down: (1, R), w_up: (R, D), b_up: (1, D)."""
    B, S, D = x.shape
    R = w_down.shape[1]
    M = B * S
    itemsize = x.dtype.itemsize

    # One-time cast so (e.g.) bf16 activations keep the fast bf16 MXU path and the
    # resident weight VMEM footprint matches the activation dtype.
    if w_down.dtype != x.dtype:
        w_down = w_down.astype(x.dtype)
    if b_down.dtype != x.dtype:
        b_down = b_down.astype(x.dtype)
    if w_up.dtype != x.dtype:
        w_up = w_up.astype(x.dtype)
    if b_up.dtype != x.dtype:
        b_up = b_up.astype(x.dtype)

    # Lane-dense padding. Zero-padded W_down columns (with zero bias) give
    # relu(0)=0 hidden units and zero-padded W_up rows contribute nothing; zero-padded
    # x columns hit zero-padded W_down rows and the extra output columns (zero W_up
    # cols + zero b_up + zero residual) are sliced off, so numerics are unchanged.
    Rp = max(128, _round_up(R, 128))
    Dp = max(128, _round_up(D, 128))
    if Rp != R:
        w_down = jnp.pad(w_down, ((0, 0), (0, Rp - R)))
        b_down = jnp.pad(b_down, ((0, 0), (0, Rp - R)))
        w_up = jnp.pad(w_up, ((0, Rp - R), (0, 0)))
    if Dp != D:
        w_down = jnp.pad(w_down, ((0, Dp - D), (0, 0)))
        w_up = jnp.pad(w_up, ((0, 0), (0, Dp - D)))
        b_up = jnp.pad(b_up, ((0, 0), (0, Dp - D)))

    x2d = x.reshape(M, D)
    if Dp != D:
        x2d = jnp.pad(x2d, ((0, 0), (0, Dp - D)))   # only needed when D % 128 != 0

    dchunk = _pick_dchunk(Dp)
    n_chunks = Dp // dchunk

    tile_budget, vmem_limit = _vmem_config()
    tm = _choose_tm(M, Dp, Rp, dchunk, itemsize, tile_budget)
    grid = (pl.cdiv(M, tm),)   # Pallas masks the partial last block

    w_bytes = (w_down.size + b_down.size + w_up.size + b_up.size) * w_down.dtype.itemsize
    cost = pl.CostEstimate(
        flops=4 * M * Dp * Rp,                      # two (M, Dp, Rp) matmuls
        transcendentals=0,
        bytes_accessed=2 * M * Dp * itemsize + int(w_bytes),
    )

    kernel = functools.partial(_adapter_kernel, dchunk=dchunk, n_chunks=n_chunks)

    out2d = pl.pallas_call(
        kernel,
        out_shape=jax.ShapeDtypeStruct((M, Dp), x.dtype),
        grid_spec=pltpu.PrefetchScalarGridSpec(
            num_scalar_prefetch=0,
            grid=grid,
            in_specs=[
                # x row tile: pipelined (double-buffered by default).
                pl.BlockSpec((tm, Dp), lambda i: (i, 0)),
                # Constant-index operands: fetched once, single-buffered.
                pl.BlockSpec((Dp, Rp), lambda i: (0, 0), pipeline_mode=pl.Buffered(1)),
                pl.BlockSpec((1, Rp), lambda i: (0, 0), pipeline_mode=pl.Buffered(1)),
                pl.BlockSpec((Rp, Dp), lambda i: (0, 0), pipeline_mode=pl.Buffered(1)),
                pl.BlockSpec((1, Dp), lambda i: (0, 0), pipeline_mode=pl.Buffered(1)),
            ],
            out_specs=pl.BlockSpec((tm, Dp), lambda i: (i, 0)),
        ),
        compiler_params=pltpu.CompilerParams(
            dimension_semantics=("parallel",),      # megacore-shardable row axis (v7x)
            vmem_limit_bytes=vmem_limit,
        ),
        cost_estimate=cost,
    )(x2d, w_down, b_down, w_up, b_up)

    if Dp != D:
        out2d = out2d[:, :D]
    return out2d.reshape(B, S, D)


def init_adapter_params(key, input_dim, reduction_dim, dtype=jnp.float32):
    """Deterministic init mimicking nn.Linear's default uniform(-1/sqrt(fan_in), ...)."""
    k1, k2, k3, k4 = jax.random.split(key, 4)
    lim_d = 1.0 / jnp.sqrt(input_dim)       # fan_in of down_project
    lim_u = 1.0 / jnp.sqrt(reduction_dim)   # fan_in of up_project
    # Stored transposed vs. PyTorch (weight @ x^T convention) so the kernel does x @ W.
    w_down = jax.random.uniform(k1, (input_dim, reduction_dim), dtype, -lim_d, lim_d)
    b_down = jax.random.uniform(k2, (1, reduction_dim), dtype, -lim_d, lim_d)
    w_up = jax.random.uniform(k3, (reduction_dim, input_dim), dtype, -lim_u, lim_u)
    b_up = jax.random.uniform(k4, (1, input_dim), dtype, -lim_u, lim_u)
    return w_down, b_down, w_up, b_up


if __name__ == "__main__":
    # Small shapes: batch=2, seq=8, hidden(input_dim)=32, reduction_dim=8
    B, S, D, R = 2, 8, 32, 8

    key = jax.random.PRNGKey(0)
    kx, kp = jax.random.split(key)
    x = jax.random.normal(kx, (B, S, D), dtype=jnp.float32)
    w_down, b_down, w_up, b_up = init_adapter_params(kp, D, R)

    out = adapter_forward(x, w_down, b_down, w_up, b_up)
    out = jax.block_until_ready(out)

    # Pure-JAX reference check of the fused kernel.
    h_ref = jnp.maximum(x @ w_down + b_down[0], 0.0)
    ref = x + h_ref @ w_up + b_up[0]
    assert out.shape == (B, S, D)
    assert jnp.allclose(out, ref, atol=1e-5, rtol=1e-5)

    print("KERNEL_OK")
</pallas_src>

<mosaic_0001>
module attributes {stable_mosaic.version = 11 : i64} {
  func.func @_adapter_kernel(%arg0: i32, %arg1: memref<8x128xf32, #tpu.memory_space<vmem>>, %arg2: memref<128x128xf32, #tpu.memory_space<vmem>>, %arg3: memref<1x128xf32, #tpu.memory_space<vmem>>, %arg4: memref<128x128xf32, #tpu.memory_space<vmem>>, %arg5: memref<1x128xf32, #tpu.memory_space<vmem>>, %arg6: memref<8x128xf32, #tpu.memory_space<vmem>>) attributes {dimension_semantics = [#tpu.dimension_semantics<parallel>], iteration_bounds = array<i64: 2>, scalar_prefetch = 0 : i64, scratch_operands = 0 : i64, tpu.core_type = #tpu.core_type<tc>, window_params = [{transform_indices = @transform_0, window_bounds = array<i64: 8, 128>}, {pipeline_mode = #tpu.pipeline_mode<synchronous>, transform_indices = @transform_1, window_bounds = array<i64: 128, 128>}, {pipeline_mode = #tpu.pipeline_mode<synchronous>, transform_indices = @transform_2, window_bounds = array<i64: 1, 128>}, {pipeline_mode = #tpu.pipeline_mode<synchronous>, transform_indices = @transform_3, window_bounds = array<i64: 128, 128>}, {pipeline_mode = #tpu.pipeline_mode<synchronous>, transform_indices = @transform_4, window_bounds = array<i64: 1, 128>}, {transform_indices = @transform_5, window_bounds = array<i64: 8, 128>}]} {
    %c0 = arith.constant 0 : index
    %c0_0 = arith.constant 0 : index
    %0 = vector.load %arg1[%c0, %c0_0] : memref<8x128xf32, #tpu.memory_space<vmem>>, vector<8x128xf32>
    %c0_1 = arith.constant 0 : index
    %c0_2 = arith.constant 0 : index
    %1 = vector.load %arg2[%c0_1, %c0_2] : memref<128x128xf32, #tpu.memory_space<vmem>>, vector<128x128xf32>
    %cst = arith.constant dense<0.000000e+00> : vector<8x128xf32>
    %2 = tpu.matmul %0, %1, %cst {dimension_numbers = #tpu.dot_dimension_numbers<[1], [0], [0], [1], [0, 0, 1, 1], [], []>} : vector<8x128xf32>, vector<128x128xf32>, vector<8x128xf32> -> vector<8x128xf32>
    %c0_3 = arith.constant 0 : index
    %c0_4 = arith.constant 0 : index
    %3 = vector.load %arg3[%c0_3, %c0_4] : memref<1x128xf32, #tpu.memory_space<vmem>>, vector<1x128xf32>
    %4 = vector.broadcast %3 : vector<1x128xf32> to vector<8x128xf32>
    %5 = arith.addf %2, %4 : vector<8x128xf32>
    %cst_5 = arith.constant 0.000000e+00 : f32
    %6 = vector.broadcast %cst_5 : f32 to vector<8x128xf32>
    %7 = arith.maximumf %5, %6 : vector<8x128xf32>
    %c0_6 = arith.constant 0 : index
    %c0_7 = arith.constant 0 : index
    %8 = vector.load %arg4[%c0_6, %c0_7] : memref<128x128xf32, #tpu.memory_space<vmem>>, vector<128x128xf32>
    %cst_8 = arith.constant dense<0.000000e+00> : vector<8x128xf32>
    %9 = tpu.matmul %7, %8, %cst_8 {dimension_numbers = #tpu.dot_dimension_numbers<[1], [0], [0], [1], [0, 0, 1, 1], [], []>} : vector<8x128xf32>, vector<128x128xf32>, vector<8x128xf32> -> vector<8x128xf32>
    %c0_9 = arith.constant 0 : index
    %c0_10 = arith.constant 0 : index
    %10 = vector.load %arg5[%c0_9, %c0_10] : memref<1x128xf32, #tpu.memory_space<vmem>>, vector<1x128xf32>
    %11 = vector.broadcast %10 : vector<1x128xf32> to vector<8x128xf32>
    %12 = arith.addf %9, %11 : vector<8x128xf32>
    %13 = arith.addf %12, %0 : vector<8x128xf32>
    %c0_11 = arith.constant 0 : index
    %c0_12 = arith.constant 0 : index
    %14 = vector.load %arg6[%c0_11, %c0_12] : memref<8x128xf32, #tpu.memory_space<vmem>>, vector<8x128xf32>
    tpu.vector_store %arg6[%c0_11, %c0_12], %13 {strides = array<i32>} : memref<8x128xf32, #tpu.memory_space<vmem>>, vector<8x128xf32>,
    return
  }
  func.func @transform_0(%arg0: i32) -> (i32, i32) {
    %c0_i32 = arith.constant 0 : i32
    %c0_i32_0 = arith.constant 0 : i32
    return %arg0, %c0_i32 : i32, i32
  }
  func.func @transform_1(%arg0: i32) -> (i32, i32) {
    %c0_i32 = arith.constant 0 : i32
    %c0_i32_0 = arith.constant 0 : i32
    %c0_i32_1 = arith.constant 0 : i32
    return %c0_i32, %c0_i32_0 : i32, i32
  }
  func.func @transform_2(%arg0: i32) -> (i32, i32) {
    %c0_i32 = arith.constant 0 : i32
    %c0_i32_0 = arith.constant 0 : i32
    %c0_i32_1 = arith.constant 0 : i32
    return %c0_i32, %c0_i32_0 : i32, i32
  }
  func.func @transform_3(%arg0: i32) -> (i32, i32) {
    %c0_i32 = arith.constant 0 : i32
    %c0_i32_0 = arith.constant 0 : i32
    %c0_i32_1 = arith.constant 0 : i32
    return %c0_i32, %c0_i32_0 : i32, i32
  }
  func.func @transform_4(%arg0: i32) -> (i32, i32) {
    %c0_i32 = arith.constant 0 : i32
    %c0_i32_0 = arith.constant 0 : i32
    %c0_i32_1 = arith.constant 0 : i32
    return %c0_i32, %c0_i32_0 : i32, i32
  }
  func.func @transform_5(%arg0: i32) -> (i32, i32) {
    %c0_i32 = arith.constant 0 : i32
    %c0_i32_0 = arith.constant 0 : i32
    return %arg0, %c0_i32 : i32, i32
  }
}

</mosaic_0001>

<llo_original>
// kernel: adapter_forward.1
$region0: #{adapter_forward.1}
  #allocation0 [shape = 'u32[]', space=smem, size = 0x4, offset = 0x4, fixed_abs, tag = 'smem constant byte address 0x4 - core index']
  #allocation1 [shape = 'u32[144,128]{1,0:T(1,128)}', space=vmem, size = 0x12000, scoped, tag = 'internal scratch']
  %s0 = inlined_call_operand.vmem [shape: f32[16,128], index: 0, kind: input, shape index: {}]
  %s1 = inlined_call_operand.vmem [shape: f32[128,128], index: 1, kind: input, shape index: {}]
  %s2 = inlined_call_operand.vmem [shape: f32[1,128], index: 2, kind: input, shape index: {}]
  %s3 = inlined_call_operand.vmem [shape: f32[128,128], index: 3, kind: input, shape index: {}]
  %s4 = inlined_call_operand.vmem [shape: f32[1,128], index: 4, kind: input, shape index: {}]
  %s5 = inlined_call_operand.vmem [shape: f32[16,128], index: 5, kind: output, shape index: {}]
  %s6 = sld [smem:[#allocation0]]
  $region53: #{adapter_forward.1} parent=0
    _
  %s8 = ssub.s32 1, %s6
  %s9 = scalar_select 0, %s8, %s6
  loop: start=0, step=1, limit=4
  $region2: #{adapter_forward.1} parent=0 // loop_pre_header
    _
  $region3: #{adapter_forward.1} parent=0 // loop_header
    %s11 = sphi 0, %s15
    %p12 = scmp.ge.s32.totalorder %s11, 4
    %s21 = sphi 0, %s23
    %s24 = sphi 0, %s21
    %s25 = sphi 0, %s24
    %s41 = sphi 0, %s25
    %s45 = sphi 0, %s45
    %s47 = sphi 0, %s45
    %s48 = sphi 0, %s47
    %s62 = sphi 0, %s48
    %s66 = sphi 0, %s66
    %s68 = sphi 0, %s66
    %s69 = sphi 0, %s68
    %s83 = sphi 0, %s69
    %s87 = sphi 0, %s87
    %s89 = sphi 0, %s87
    %s90 = sphi 0, %s89
    %s104 = sphi 0, %s90
    %s108 = sphi 0, %s108
    %s110 = sphi 0, %s108
    %s111 = sphi 0, %s110
    %s125 = sphi 0, %s111
    %s131 = sphi 0, %s133
    %s134 = sphi 0, %s131
    %s135 = sphi 0, %s134
    %s151 = sphi 0, %s135
  $region4: #{adapter_forward.1} parent=0 // loop_header_branch
    %14 = sbr.rel (%p12) target = $region8
  $region5: #{adapter_forward.1} parent=0 // loop_body
    %s16 = ssub.s32 %s11, 1
    %s17 = ssub.s32 %s11, 2
    %s18 = sadd.s32 %s11, 1
    %s19 = ssub.s32 %s11, %s18
    %p20 = scmp.eq.s32.totalorder %s19, 0
    %s22 = sadd.s32 %s21, 1
    %s23 = scalar_select %p20, %s21, %s22
    %p26 = pneg %p20
    %p27 = scmp.eq.s32.totalorder %s11, 1
    %p28 = por %p26, %p27
    %p29 = scmp.ne.s32.totalorder %s21, %s24
    %p30 = scmp.eq.s32.totalorder %s11, 0
    %p31 = por %p29, %p30
    %p32 = scmp.ne.s32.totalorder %s21, %s24
    %p33 = scmp.eq.s32.totalorder %s16, 1
    %p34 = por %p32, %p33
    %p35 = scmp.ne.s32.totalorder %s24, %s25
    %p36 = scmp.eq.s32.totalorder %s16, 0
    %p37 = por %p35, %p36
    %p38 = scmp.ne.s32.totalorder %s24, %s25
    %p39 = scmp.eq.s32.totalorder %s17, 1
    %p40 = por %p38, %p39
    %p42 = scmp.ne.s32.totalorder %s25, %s41
    %p43 = scmp.eq.s32.totalorder %s17, 0
    %p44 = por %p42, %p43
    %s46 = sadd.s32 %s45, 1
    %p49 = scmp.eq.s32.totalorder %s11, 1
    %p50 = scmp.ne.s32.totalorder %s45, %s47
    %p51 = scmp.eq.s32.totalorder %s11, 0
    %p52 = por %p50, %p51
    %p53 = scmp.ne.s32.totalorder %s45, %s47
    %p54 = scmp.eq.s32.totalorder %s16, 1
    %p55 = por %p53, %p54
    %p56 = scmp.ne.s32.totalorder %s47, %s48
    %p57 = scmp.eq.s32.totalorder %s16, 0
    %p58 = por %p56, %p57
    %p59 = scmp.ne.s32.totalorder %s47, %s48
    %p60 = scmp.eq.s32.totalorder %s17, 1
    %p61 = por %p59, %p60
    %p63 = scmp.ne.s32.totalorder %s48, %s62
    %p64 = scmp.eq.s32.totalorder %s17, 0
    %p65 = por %p63, %p64
    %s67 = sadd.s32 %s66, 1
    %p70 = scmp.eq.s32.totalorder %s11, 1
    %p71 = scmp.ne.s32.totalorder %s66, %s68
    %p72 = scmp.eq.s32.totalorder %s11, 0
    %p73 = por %p71, %p72
    %p74 = scmp.ne.s32.totalorder %s66, %s68
    %p75 = scmp.eq.s32.totalorder %s16, 1
    %p76 = por %p74, %p75
    %p77 = scmp.ne.s32.totalorder %s68, %s69
    %p78 = scmp.eq.s32.totalorder %s16, 0
    %p79 = por %p77, %p78
    %p80 = scmp.ne.s32.totalorder %s68, %s69
    %p81 = scmp.eq.s32.totalorder %s17, 1
    %p82 = por %p80, %p81
    %p84 = scmp.ne.s32.totalorder %s69, %s83
    %p85 = scmp.eq.s32.totalorder %s17, 0
    %p86 = por %p84, %p85
    %s88 = sadd.s32 %s87, 1
    %p91 = scmp.eq.s32.totalorder %s11, 1
    %p92 = scmp.ne.s32.totalorder %s87, %s89
    %p93 = scmp.eq.s32.totalorder %s11, 0
    %p94 = por %p92, %p93
    %p95 = scmp.ne.s32.totalorder %s87, %s89
    %p96 = scmp.eq.s32.totalorder %s16, 1
    %p97 = por %p95, %p96
    %p98 = scmp.ne.s32.totalorder %s89, %s90
    %p99 = scmp.eq.s32.totalorder %s16, 0
    %p100 = por %p98, %p99
    %p101 = scmp.ne.s32.totalorder %s89, %s90
    %p102 = scmp.eq.s32.totalorder %s17, 1
    %p103 = por %p101, %p102
    %p105 = scmp.ne.s32.totalorder %s90, %s104
    %p106 = scmp.eq.s32.totalorder %s17, 0
    %p107 = por %p105, %p106
    %s109 = sadd.s32 %s108, 1
    %p112 = scmp.eq.s32.totalorder %s11, 1
    %p113 = scmp.ne.s32.totalorder %s108, %s110
    %p114 = scmp.eq.s32.totalorder %s11, 0
    %p115 = por %p113, %p114
    %p116 = scmp.ne.s32.totalorder %s108, %s110
    %p117 = scmp.eq.s32.totalorder %s16, 1
    %p118 = por %p116, %p117
    %p119 = scmp.ne.s32.totalorder %s110, %s111
    %p120 = scmp.eq.s32.totalorder %s16, 0
    %p121 = por %p119, %p120
    %p122 = scmp.ne.s32.totalorder %s110, %s111
    %p123 = scmp.eq.s32.totalorder %s17, 1
    %p124 = por %p122, %p123
    %p126 = scmp.ne.s32.totalorder %s111, %s125
    %p127 = scmp.eq.s32.totalorder %s17, 0
    %p128 = por %p126, %p127
    %s129 = ssub.s32 %s11, %s18
    %p130 = scmp.eq.s32.totalorder %s129, 0
    %s132 = sadd.s32 %s131, 1
    %s133 = scalar_select %p130, %s131, %s132
    %p136 = pneg %p130
    %p137 = scmp.eq.s32.totalorder %s11, 1
    %p138 = por %p136, %p137
    %p139 = scmp.ne.s32.totalorder %s131, %s134
    %p140 = scmp.eq.s32.totalorder %s11, 0
    %p141 = por %p139, %p140
    %p142 = scmp.ne.s32.totalorder %s131, %s134
    %p143 = scmp.eq.s32.totalorder %s16, 1
    %p144 = por %p142, %p143
    %p145 = scmp.ne.s32.totalorder %s134, %s135
    %p146 = scmp.eq.s32.totalorder %s16, 0
    %p147 = por %p145, %p146
    %p148 = scmp.ne.s32.totalorder %s134, %s135
    %p149 = scmp.eq.s32.totalorder %s17, 1
    %p150 = por %p148, %p149
    %p152 = scmp.ne.s32.totalorder %s135, %s151
    %p153 = scmp.eq.s32.totalorder %s17, 0
    %p154 = por %p152, %p153
    %p155 = scmp.le.s32.totalorder 1, %s11
    %p156 = scmp.lt.s32.totalorder %s11, 3
    %p157 = pnand %p155, %p156
    %p158 = pneg %p157
    // Predicated region
    $region9: #{adapter_forward.1} parent=5 // pred_check
      _
    $region10: #{adapter_forward.1} parent=5 // pred_check_branch
      %160 = sbr.rel (%p157) target = $region12
    $region11: #{adapter_forward.1} parent=5 // pred_region
      %s161 = ssub.s32 %s11, 1
      // Predicated region
      $region13: #{adapter_forward.1} parent=11 // pred_check
        %p162 = pneg %p58
      $region14: #{adapter_forward.1} parent=11 // pred_check_branch
        %164 = sbr.rel (%p162) target = $region16
      $region15: #{adapter_forward.1} parent=11 // pred_region
        _
      $region16: #{adapter_forward.1} parent=11 // pred_fallthru
        _
      // Predicated region
      $region17: #{adapter_forward.1} parent=11 // pred_check
        %p165 = pneg %p79
      $region18: #{adapter_forward.1} parent=11 // pred_check_branch
        %167 = sbr.rel (%p165) target = $region20
      $region19: #{adapter_forward.1} parent=11 // pred_region
        _
      $region20: #{adapter_forward.1} parent=11 // pred_fallthru
        _
      // Predicated region
      $region21: #{adapter_forward.1} parent=11 // pred_check
        %p168 = pneg %p100
      $region22: #{adapter_forward.1} parent=11 // pred_check_branch
        %170 = sbr.rel (%p168) target = $region24
      $region23: #{adapter_forward.1} parent=11 // pred_region
        _
      $region24: #{adapter_forward.1} parent=11 // pred_fallthru
        _
      // Predicated region
      $region25: #{adapter_forward.1} parent=11 // pred_check
        %p171 = pneg %p121
      $region26: #{adapter_forward.1} parent=11 // pred_check_branch
        %173 = sbr.rel (%p171) target = $region28
      $region27: #{adapter_forward.1} parent=11 // pred_region
        _
      $region28: #{adapter_forward.1} parent=11 // pred_fallthru
        _
    $region12: #{adapter_forward.1} parent=5 // pred_fallthru
      _
    %p174 = scmp.lt.s32.totalorder %s11, 2
    // Predicated region
    $region29: #{adapter_forward.1} parent=5 // pred_check
      %p175 = pneg %p174
    $region30: #{adapter_forward.1} parent=5 // pred_check_branch
      %177 = sbr.rel (%p175) target = $region32
    $region31: #{adapter_forward.1} parent=5 // pred_region
      // Predicated region
      $region33: #{adapter_forward.1} parent=31 // pred_check
        %p178 = pneg %p31
      $region34: #{adapter_forward.1} parent=31 // pred_check_branch
        %180 = sbr.rel (%p178) target = $region36
      $region35: #{adapter_forward.1} parent=31 // pred_region
        %p181 = scmp.lt.s32.totalorder %s11, 1
        %s182 = scalar_select %p181, %s11, 1
        %s183 = smul.addr %s182, 8
        %s184 = scalar_lea.vmem %s0, %s183
      $region36: #{adapter_forward.1} parent=31 // pred_fallthru
        _
    $region32: #{adapter_forward.1} parent=5 // pred_fallthru
      _
    %p185 = scmp.le.s32.totalorder 1, %s11
    %p186 = scmp.lt.s32.totalorder %s11, 3
    %p187 = pnand %p185, %p186
    %p188 = pneg %p187
    // Predicated region
    $region37: #{adapter_forward.1} parent=5 // pred_check
      _
    $region38: #{adapter_forward.1} parent=5 // pred_check_branch
      %190 = sbr.rel (%p187) target = $region40
    $region39: #{adapter_forward.1} parent=5 // pred_region
      %s191 = ssub.s32 %s11, 1
      %p192 = scmp.lt.s32.totalorder %s16, 1
      %s193 = scalar_select %p192, %s16, 1
      %s194 = smul.addr %s193, 8
      %s195 = scalar_lea.vmem %s0, %s194
      %p196 = pneg %p37
      %p197 = pneg %p34
      %p198 = pneg %p58
      %p199 = pneg %p55
      %p200 = pneg %p79
      %p201 = pneg %p76
      %p202 = pneg %p100
      %p203 = pneg %p97
      %p204 = pneg %p121
      %p205 = pneg %p118
      %p206 = pneg %p147
      %p207 = pneg %p144
      %p208 = scmp.lt.s32.totalorder %s16, 1
      %s209 = scalar_select %p208, %s16, 1
      %s210 = smul.addr %s209, 8
      %s211 = scalar_lea.vmem %s5, %s210
      %p212 = scmp.lt.s32.totalorder %s16, 1
      %s213 = scalar_select %p212, %s16, 1
      %s214 = smul.addr %s213, 8
      %s215 = scalar_lea.vmem %s0, %s214
      %p216 = scmp.lt.s32.totalorder %s16, 1
      %s217 = scalar_select %p216, %s16, 1
      %s218 = smul.addr %s217, 8
      %s219 = scalar_lea.vmem %s5, %s218
      %v220 = vld [vmem:[%s215] sm:$0xff]
      %v221 = vld [vmem:[%s1] sm:$0xff]
      %v222 = vld [vmem:[%s1 + $0x8] sm:$0xff]
      %v223 = vld [vmem:[%s1 + $0x10] sm:$0xff]
      %v224 = vld [vmem:[%s1 + $0x18] sm:$0xff]
      %v225 = vld [vmem:[%s1 + $0x20] sm:$0xff]
      %v226 = vld [vmem:[%s1 + $0x28] sm:$0xff]
      %v227 = vld [vmem:[%s1 + $0x30] sm:$0xff]
      %v228 = vld [vmem:[%s1 + $0x38] sm:$0xff]
      %v229 = vld [vmem:[%s1 + $0x40] sm:$0xff]
      %v230 = vld [vmem:[%s1 + $0x48] sm:$0xff]
      %v231 = vld [vmem:[%s1 + $0x50] sm:$0xff]
      %v232 = vld [vmem:[%s1 + $0x58] sm:$0xff]
      %v233 = vld [vmem:[%s1 + $0x60] sm:$0xff]
      %v234 = vld [vmem:[%s1 + $0x68] sm:$0xff]
      %v235 = vld [vmem:[%s1 + $0x70] sm:$0xff]
      %v236 = vld [vmem:[%s1 + $0x78] sm:$0xff]
      %v237 = vld [vmem:[%s2] sm:$0x1]
      %v239 = vlaneseq
      %v240 = vshrl.u32 %v239, 7
      %v241 = vsub.s32 0, %v240
      %v242 = vrot.slane %v237, %v241
      %244 = vmatprep.subr.mxu0 0.0
      %245 = vmatpush1.msra.mxu0 %v221
      %246 = vmatprep.subr.mxu0 0.0
      %247 = vmatpush1.msra.mxu0 %v222
      %248 = vmatprep.subr.mxu0 0.0
      %249 = vmatpush1.msra.mxu0 %v223
      %250 = vmatprep.subr.mxu0 0.0
      %251 = vmatpush1.msra.mxu0 %v224
      %252 = vmatprep.subr.mxu0 0.0
      %253 = vmatpush1.msra.mxu0 %v225
      %254 = vmatprep.subr.mxu0 0.0
      %255 = vmatpush1.msra.mxu0 %v226
      %256 = vmatprep.subr.mxu0 0.0
      %257 = vmatpush1.msra.mxu0 %v227
      %258 = vmatprep.subr.mxu0 0.0
      %259 = vmatpush1.msra.mxu0 %v228
      %260 = vmatprep.subr.mxu0 0.0
      %261 = vmatpush1.msra.mxu0 %v229
      %262 = vmatprep.subr.mxu0 0.0
      %263 = vmatpush1.msra.mxu0 %v230
      %264 = vmatprep.subr.mxu0 0.0
      %265 = vmatpush1.msra.mxu0 %v231
      %266 = vmatprep.subr.mxu0 0.0
      %267 = vmatpush1.msra.mxu0 %v232
      %268 = vmatprep.subr.mxu0 0.0
      %269 = vmatpush1.msra.mxu0 %v233
      %270 = vmatprep.subr.mxu0 0.0
      %271 = vmatpush1.msra.mxu0 %v234
      %272 = vmatprep.subr.mxu0 0.0
      %273 = vmatpush1.msra.mxu0 %v235
      %274 = vmatprep.subr.mxu0 0.0
      %275 = vmatpush1.msra.mxu0 %v236
      %276 = vmatprep.subr.mxu0 0.0
      %277 = vmatpush1.msra.mxu0 0.0
      %278 = vmatprep.subr.mxu0 0.0
      %279 = vmatpush1.msra.mxu0 0.0
      %280 = vmatprep.subr.mxu0 0.0
      %281 = vmatpush1.msra.mxu0 0.0
      %282 = vmatprep.subr.mxu0 0.0
      %283 = vmatpush1.msra.mxu0 0.0
      %284 = vmatprep.subr.mxu0 0.0
      %285 = vmatpush1.msra.mxu0 0.0
      %286 = vmatprep.subr.mxu0 0.0
      %287 = vmatpush1.msra.mxu0 0.0
      %288 = vmatprep.subr.mxu0 0.0
      %289 = vmatpush1.msra.mxu0 0.0
      %290 = vmatprep.subr.mxu0 0.0
      %291 = vmatpush1.msra.mxu0 0.0
      %292 = vmatprep.subr.mxu0 0.0
      %293 = vmatpush1.msra.mxu0 0.0
      %294 = vmatprep.subr.mxu0 0.0
      %295 = vmatpush1.msra.mxu0 0.0
      %296 = vmatprep.subr.mxu0 0.0
      %297 = vmatpush1.msra.mxu0 0.0
      %298 = vmatprep.subr.mxu0 0.0
      %299 = vmatpush1.msra.mxu0 0.0
      %300 = vmatprep.subr.mxu0 0.0
      %301 = vmatpush1.msra.mxu0 0.0
      %302 = vmatprep.subr.mxu0 0.0
      %303 = vmatpush1.msra.mxu0 0.0
      %304 = vmatprep.subr.mxu0 0.0
      %305 = vmatpush1.msra.mxu0 0.0
      %306 = vmatprep.subr.mxu0 0.0
      %307 = vmatpush1.msra.mxu0 0.0
      %308 = vmatprep.mubr.f32.mxu0 0.0
      %309 = vmatmul.mubr.f32.gmra.mrb[0].mxu0 %v220
      %v310 = vpop.f32.mrb[0].mxu0
      %v311 = vadd.f32 %v242, %v310
      %v312 = vpop.f32.mrb[0].mxu0
      %313 = vdwg.mxu0
      %v314 = vmax.f32 %v311, 0.0
      %v315 = vld [vmem:[%s3] sm:$0xff]
      %v316 = vld [vmem:[%s3 + $0x8] sm:$0xff]
      %v317 = vld [vmem:[%s3 + $0x10] sm:$0xff]
      %v318 = vld [vmem:[%s3 + $0x18] sm:$0xff]
      %v319 = vld [vmem:[%s3 + $0x20] sm:$0xff]
      %v320 = vld [vmem:[%s3 + $0x28] sm:$0xff]
      %v321 = vld [vmem:[%s3 + $0x30] sm:$0xff]
      %v322 = vld [vmem:[%s3 + $0x38] sm:$0xff]
      %v323 = vld [vmem:[%s3 + $0x40] sm:$0xff]
      %v324 = vld [vmem:[%s3 + $0x48] sm:$0xff]
      %v325 = vld [vmem:[%s3 + $0x50] sm:$0xff]
      %v326 = vld [vmem:[%s3 + $0x58] sm:$0xff]
      %v327 = vld [vmem:[%s3 + $0x60] sm:$0xff]
      %v328 = vld [vmem:[%s3 + $0x68] sm:$0xff]
      %v329 = vld [vmem:[%s3 + $0x70] sm:$0xff]
      %v330 = vld [vmem:[%s3 + $0x78] sm:$0xff]
      %v331 = vld [vmem:[%s4] sm:$0x1]
      %v333 = vlaneseq
      %v334 = vshrl.u32 %v333, 7
      %v335 = vsub.s32 0, %v334
      %v336 = vrot.slane %v331, %v335
      %338 = vmatprep.subr.mxu0 0.0
      %339 = vmatpush1.msra.mxu0 %v315
      %340 = vmatprep.subr.mxu0 0.0
      %341 = vmatpush1.msra.mxu0 %v316
      %342 = vmatprep.subr.mxu0 0.0
      %343 = vmatpush1.msra.mxu0 %v317
      %344 = vmatprep.subr.mxu0 0.0
      %345 = vmatpush1.msra.mxu0 %v318
      %346 = vmatprep.subr.mxu0 0.0
      %347 = vmatpush1.msra.mxu0 %v319
      %348 = vmatprep.subr.mxu0 0.0
      %349 = vmatpush1.msra.mxu0 %v320
      %350 = vmatprep.subr.mxu0 0.0
      %351 = vmatpush1.msra.mxu0 %v321
      %352 = vmatprep.subr.mxu0 0.0
      %353 = vmatpush1.msra.mxu0 %v322
      %354 = vmatprep.subr.mxu0 0.0
      %355 = vmatpush1.msra.mxu0 %v323
      %356 = vmatprep.subr.mxu0 0.0
      %357 = vmatpush1.msra.mxu0 %v324
      %358 = vmatprep.subr.mxu0 0.0
      %359 = vmatpush1.msra.mxu0 %v325
      %360 = vmatprep.subr.mxu0 0.0
      %361 = vmatpush1.msra.mxu0 %v326
      %362 = vmatprep.subr.mxu0 0.0
      %363 = vmatpush1.msra.mxu0 %v327
      %364 = vmatprep.subr.mxu0 0.0
      %365 = vmatpush1.msra.mxu0 %v328
      %366 = vmatprep.subr.mxu0 0.0
      %367 = vmatpush1.msra.mxu0 %v329
      %368 = vmatprep.subr.mxu0 0.0
      %369 = vmatpush1.msra.mxu0 %v330
      %370 = vmatprep.subr.mxu0 0.0
      %371 = vmatpush1.msra.mxu0 0.0
      %372 = vmatprep.subr.mxu0 0.0
      %373 = vmatpush1.msra.mxu0 0.0
      %374 = vmatprep.subr.mxu0 0.0
      %375 = vmatpush1.msra.mxu0 0.0
      %376 = vmatprep.subr.mxu0 0.0
      %377 = vmatpush1.msra.mxu0 0.0
      %378 = vmatprep.subr.mxu0 0.0
      %379 = vmatpush1.msra.mxu0 0.0
      %380 = vmatprep.subr.mxu0 0.0
      %381 = vmatpush1.msra.mxu0 0.0
      %382 = vmatprep.subr.mxu0 0.0
      %383 = vmatpush1.msra.mxu0 0.0
      %384 = vmatprep.subr.mxu0 0.0
      %385 = vmatpush1.msra.mxu0 0.0
      %386 = vmatprep.subr.mxu0 0.0
      %387 = vmatpush1.msra.mxu0 0.0
      %388 = vmatprep.subr.mxu0 0.0
      %389 = vmatpush1.msra.mxu0 0.0
      %390 = vmatprep.subr.mxu0 0.0
      %391 = vmatpush1.msra.mxu0 0.0
      %392 = vmatprep.subr.mxu0 0.0
      %393 = vmatpush1.msra.mxu0 0.0
      %394 = vmatprep.subr.mxu0 0.0
      %395 = vmatpush1.msra.mxu0 0.0
      %396 = vmatprep.subr.mxu0 0.0
      %397 = vmatpush1.msra.mxu0 0.0
      %398 = vmatprep.subr.mxu0 0.0
      %399 = vmatpush1.msra.mxu0 0.0
      %400 = vmatprep.subr.mxu0 0.0
      %401 = vmatpush1.msra.mxu0 0.0
      %402 = vmatprep.mubr.f32.mxu0 0.0
      %403 = vmatmul.mubr.f32.gmra.mrb[0].mxu0 %v314
      %v404 = vpop.f32.mrb[0].mxu0
      %v405 = vadd.f32 %v336, %v404
      %v406 = vpop.f32.mrb[0].mxu0
      %407 = vdwg.mxu0
      %v408 = vadd.f32 %v405, %v220
      %409 = vst [vmem:[%s219] sm:$0xff] %v408
      %p410 = scmp.lt.s32.totalorder %s16, 1
      %s411 = scalar_select %p410, %s16, 1
      %s412 = smul.addr %s411, 8
      %s413 = scalar_lea.vmem %s5, %s412
      // Predicated region
      $region41: #{adapter_forward.1} parent=39 // pred_check
        %p414 = pneg %p144
      $region42: #{adapter_forward.1} parent=39 // pred_check_branch
        %416 = sbr.rel (%p414) target = $region44
      $region43: #{adapter_forward.1} parent=39 // pred_region
        _
      $region44: #{adapter_forward.1} parent=39 // pred_fallthru
        _
    $region40: #{adapter_forward.1} parent=5 // pred_fallthru
      _
    %p417 = scmp.le.s32.totalorder 2, %s11
    // Predicated region
    $region45: #{adapter_forward.1} parent=5 // pred_check
      %p418 = pneg %p417
    $region46: #{adapter_forward.1} parent=5 // pred_check_branch
      %420 = sbr.rel (%p418) target = $region48
    $region47: #{adapter_forward.1} parent=5 // pred_region
      %s421 = ssub.s32 %s11, 2
      // Predicated region
      $region49: #{adapter_forward.1} parent=47 // pred_check
        %p422 = pneg %p150
      $region50: #{adapter_forward.1} parent=47 // pred_check_branch
        %424 = sbr.rel (%p422) target = $region52
      $region51: #{adapter_forward.1} parent=47 // pred_region
        %p425 = scmp.lt.s32.totalorder %s17, 1
        %s426 = scalar_select %p425, %s17, 1
        %s427 = smul.addr %s426, 8
        %s428 = scalar_lea.vmem %s5, %s427
      $region52: #{adapter_forward.1} parent=47 // pred_fallthru
        _
    $region48: #{adapter_forward.1} parent=5 // pred_fallthru
      _
  $region6: #{adapter_forward.1} parent=0 // loop_footer
    %s15 = sadd.s32 1, %s11
  $region7: #{adapter_forward.1} parent=0 // loop_footer_branch
    %10 = sbr.rel target = $region3
  $region8: #{adapter_forward.1} parent=0 // loop_exit
    _

</llo_original>
